<compile_context>
chip_gen: v5e
topology: v5e:2x2
jax: 0.10.0
libtpu: 0.0.40
codegen_flags: <defaults>
</compile_context>

<pallas_src>
import jax
import jax.numpy as jnp
from jax.experimental import pallas as pl
from jax.experimental.pallas import tpu as pltpu

HIDDEN = 256
LANE = 128
SUBLANE = 8


def _round_up(x, m):
    return (x + m - 1) // m * m


def fused_mlp_kernel(t_ref, v_ref, a_ref, i_ref,
                     w1t_ref, w1v_ref, w1a_ref, w1i_ref, b1_ref,
                     w2_ref, b2_ref, o_ref):
    # Layer 1: Linear(D_total -> 256) as four partial dots (the concat is
    # folded into row-slices of W1).  f32 operands, f32 accumulation.
    h = jnp.dot(t_ref[...], w1t_ref[...], preferred_element_type=jnp.float32)
    h = h + jnp.dot(v_ref[...], w1v_ref[...], preferred_element_type=jnp.float32)
    h = h + jnp.dot(a_ref[...], w1a_ref[...], preferred_element_type=jnp.float32)
    h = h + jnp.dot(i_ref[...], w1i_ref[...], preferred_element_type=jnp.float32)
    # Bias + ReLU (VPU, f32).
    h = jnp.maximum(h + b1_ref[...], 0.0)
    # Dropout(0.2) -> identity in eval mode.
    # Layer 2: Linear(256 -> out_dim) + Tanh, f32 end to end.
    y = jnp.dot(h, w2_ref[...], preferred_element_type=jnp.float32)
    o_ref[...] = jnp.tanh(y + b2_ref[...])


def _choose_tiling(B, block_b):
    """Pick (B_pad, TB, num_steps): minimal padding, >=2 steps when possible."""
    # >=2 grid steps when there is enough work so v7x's two TensorCores both
    # get a share of the "parallel" batch axis (v5e/v6e unaffected).
    min_steps = 2 if B >= 2 * LANE else 1
    num_steps = max(pl.cdiv(B, block_b), min_steps)
    if num_steps == 1:
        # Single full-extent block: no padding needed (block dim == array dim).
        return B, B, 1
    TB = _round_up(pl.cdiv(B, num_steps), SUBLANE)
    return TB * num_steps, TB, num_steps


def prepare_params(params, dims):
    """One-time weight prep — hoisted out of the hot forward path."""
    w1, b1, w2, b2 = params["w1"], params["b1"], params["w2"], params["b2"]
    d_total = sum(dims)
    assert w1.shape == (d_total, HIDDEN)
    out_dim = w2.shape[1]
    o1 = dims[0]
    o2 = o1 + dims[1]
    o3 = o2 + dims[2]
    return {
        "dims": tuple(dims),
        "out_dim": out_dim,
        # f32 per-modality row-slices of W1 (offsets 8/24/32 are sublane(8)-
        # aligned in f32, so no relayout copies).
        "w1t": w1[:o1].astype(jnp.float32),
        "w1v": w1[o1:o2].astype(jnp.float32),
        "w1a": w1[o2:o3].astype(jnp.float32),
        "w1i": w1[o3:].astype(jnp.float32),
        "b1": b1.reshape(1, HIDDEN).astype(jnp.float32),
        "w2": w2.astype(jnp.float32),
        "b2": b2.reshape(1, out_dim).astype(jnp.float32),
    }


def parietal_cortex_forward(tactile, vision, audio, intent, prepped, *, block_b=1024):
    """Fused 2-layer MLP over four modality inputs (concat folded into kernel)."""
    dims = prepped["dims"]
    out_dim = prepped["out_dim"]
    d_total = sum(dims)
    B = tactile.shape[0]

    B_pad, TB, num_steps = _choose_tiling(B, block_b)
    if B_pad != B:
        # Ragged batch: pad only to the chosen tile multiple (at most a few
        # sublane rows of waste, not a whole tile).
        pad = ((0, B_pad - B), (0, 0))
        tactile = jnp.pad(tactile, pad)
        vision = jnp.pad(vision, pad)
        audio = jnp.pad(audio, pad)
        intent = jnp.pad(intent, pad)

    flops = 2 * B_pad * (d_total * HIDDEN + HIDDEN * out_dim)
    bytes_accessed = (
        4 * B_pad * d_total                                     # f32 activations in
        + 4 * B_pad * out_dim                                   # f32 output (un-padded)
        + 4 * (d_total * HIDDEN + HIDDEN * out_dim)             # f32 weights
        + 4 * (HIDDEN + out_dim)                                # f32 biases
    )

    out = pl.pallas_call(
        fused_mlp_kernel,
        out_shape=jax.ShapeDtypeStruct((B_pad, out_dim), jnp.float32),
        grid_spec=pltpu.PrefetchScalarGridSpec(
            num_scalar_prefetch=0,
            grid=(num_steps,),
            in_specs=[
                # batch-tiled activations (f32 straight from HBM)
                pl.BlockSpec((TB, dims[0]), lambda i: (i, 0)),
                pl.BlockSpec((TB, dims[1]), lambda i: (i, 0)),
                pl.BlockSpec((TB, dims[2]), lambda i: (i, 0)),
                pl.BlockSpec((TB, dims[3]), lambda i: (i, 0)),
                # VMEM-resident weights / biases (constant index_map)
                pl.BlockSpec((dims[0], HIDDEN), lambda i: (0, 0)),
                pl.BlockSpec((dims[1], HIDDEN), lambda i: (0, 0)),
                pl.BlockSpec((dims[2], HIDDEN), lambda i: (0, 0)),
                pl.BlockSpec((dims[3], HIDDEN), lambda i: (0, 0)),
                pl.BlockSpec((1, HIDDEN), lambda i: (0, 0)),
                pl.BlockSpec((HIDDEN, out_dim), lambda i: (0, 0)),
                pl.BlockSpec((1, out_dim), lambda i: (0, 0)),
            ],
            # Un-padded, full-width output block (last block dim == array dim).
            out_specs=pl.BlockSpec((TB, out_dim), lambda i: (i, 0)),
        ),
        compiler_params=pltpu.CompilerParams(
            dimension_semantics=("parallel",),
        ),
        cost_estimate=pl.CostEstimate(
            flops=flops,
            transcendentals=B_pad * out_dim,
            bytes_accessed=bytes_accessed,
        ),
    )(tactile, vision, audio, intent,
      prepped["w1t"], prepped["w1v"], prepped["w1a"], prepped["w1i"],
      prepped["b1"], prepped["w2"], prepped["b2"])

    return out[:B] if B_pad != B else out


def init_params(key, tactile_dim, vision_dim, audio_dim, intent_dim, output_dim,
                hidden_dim=HIDDEN):
    """Deterministic parameter init (PyTorch-Linear-style uniform ranges)."""
    d_in = tactile_dim + vision_dim + audio_dim + intent_dim
    k1, k2, k3, k4 = jax.random.split(key, 4)
    lim1 = 1.0 / jnp.sqrt(d_in)
    lim2 = 1.0 / jnp.sqrt(hidden_dim)
    w1 = jax.random.uniform(k1, (d_in, hidden_dim), jnp.float32, -lim1, lim1)
    b1 = jax.random.uniform(k2, (1, hidden_dim), jnp.float32, -lim1, lim1)
    w2 = jax.random.uniform(k3, (hidden_dim, output_dim), jnp.float32, -lim2, lim2)
    b2 = jax.random.uniform(k4, (1, output_dim), jnp.float32, -lim2, lim2)
    return {"w1": w1, "b1": b1, "w2": w2, "b2": b2}


if __name__ == "__main__":
    # Small, module-consistent dims: tactile=8, vision=16, audio=8, intent=4 -> output=32
    tactile_dim, vision_dim, audio_dim, intent_dim, output_dim = 8, 16, 8, 4, 32
    batch = 2

    key = jax.random.PRNGKey(0)
    kp, kt, kv, ka, ki = jax.random.split(key, 5)

    params = init_params(kp, tactile_dim, vision_dim, audio_dim, intent_dim, output_dim)
    prepped = prepare_params(params, (tactile_dim, vision_dim, audio_dim, intent_dim))

    tactile = jax.random.normal(kt, (batch, tactile_dim), jnp.float32)
    vision = jax.random.normal(kv, (batch, vision_dim), jnp.float32)
    audio = jax.random.normal(ka, (batch, audio_dim), jnp.float32)
    intent = jax.random.normal(ki, (batch, intent_dim), jnp.float32)

    out = parietal_cortex_forward(tactile, vision, audio, intent, prepped)
    out = jax.block_until_ready(out)

    # Pure-JAX f32 reference (eval-mode dropout = identity).  Kernel is f32
    # end-to-end; tolerance covers default-precision MXU matmuls.
    x = jnp.concatenate([tactile, vision, audio, intent], axis=-1)
    ref = jnp.tanh(
        jnp.maximum(x @ params["w1"] + params["b1"], 0.0) @ params["w2"] + params["b2"]
    )
    assert out.shape == (batch, output_dim)
    assert jnp.allclose(out, ref, atol=2e-2, rtol=2e-2)

    print("KERNEL_OK")
</pallas_src>

<mosaic_0001>
module attributes {stable_mosaic.version = 11 : i64} {
  func.func @fused_mlp_kernel(%arg0: i32, %arg1: memref<2x8xf32, #tpu.memory_space<vmem>>, %arg2: memref<2x16xf32, #tpu.memory_space<vmem>>, %arg3: memref<2x8xf32, #tpu.memory_space<vmem>>, %arg4: memref<2x4xf32, #tpu.memory_space<vmem>>, %arg5: memref<8x256xf32, #tpu.memory_space<vmem>>, %arg6: memref<16x256xf32, #tpu.memory_space<vmem>>, %arg7: memref<8x256xf32, #tpu.memory_space<vmem>>, %arg8: memref<4x256xf32, #tpu.memory_space<vmem>>, %arg9: memref<1x256xf32, #tpu.memory_space<vmem>>, %arg10: memref<256x32xf32, #tpu.memory_space<vmem>>, %arg11: memref<1x32xf32, #tpu.memory_space<vmem>>, %arg12: memref<2x32xf32, #tpu.memory_space<vmem>>) attributes {dimension_semantics = [#tpu.dimension_semantics<parallel>], iteration_bounds = array<i64: 1>, scalar_prefetch = 0 : i64, scratch_operands = 0 : i64, tpu.core_type = #tpu.core_type<tc>, window_params = [{transform_indices = @transform_0, window_bounds = array<i64: 2, 8>}, {transform_indices = @transform_1, window_bounds = array<i64: 2, 16>}, {transform_indices = @transform_2, window_bounds = array<i64: 2, 8>}, {transform_indices = @transform_3, window_bounds = array<i64: 2, 4>}, {pipeline_mode = #tpu.pipeline_mode<synchronous>, transform_indices = @transform_4, window_bounds = array<i64: 8, 256>}, {pipeline_mode = #tpu.pipeline_mode<synchronous>, transform_indices = @transform_5, window_bounds = array<i64: 16, 256>}, {pipeline_mode = #tpu.pipeline_mode<synchronous>, transform_indices = @transform_6, window_bounds = array<i64: 8, 256>}, {pipeline_mode = #tpu.pipeline_mode<synchronous>, transform_indices = @transform_7, window_bounds = array<i64: 4, 256>}, {pipeline_mode = #tpu.pipeline_mode<synchronous>, transform_indices = @transform_8, window_bounds = array<i64: 1, 256>}, {pipeline_mode = #tpu.pipeline_mode<synchronous>, transform_indices = @transform_9, window_bounds = array<i64: 256, 32>}, {pipeline_mode = #tpu.pipeline_mode<synchronous>, transform_indices = @transform_10, window_bounds = array<i64: 1, 32>}, {transform_indices = @transform_11, window_bounds = array<i64: 2, 32>}]} {
    %c0 = arith.constant 0 : index
    %c0_0 = arith.constant 0 : index
    %0 = vector.load %arg1[%c0, %c0_0] : memref<2x8xf32, #tpu.memory_space<vmem>>, vector<2x8xf32>
    %c0_1 = arith.constant 0 : index
    %c0_2 = arith.constant 0 : index
    %1 = vector.load %arg5[%c0_1, %c0_2] : memref<8x256xf32, #tpu.memory_space<vmem>>, vector<8x256xf32>
    %cst = arith.constant dense<0.000000e+00> : vector<2x256xf32>
    %2 = tpu.matmul %0, %1, %cst {dimension_numbers = #tpu.dot_dimension_numbers<[1], [0], [0], [1], [0, 0, 1, 1], [], []>} : vector<2x8xf32>, vector<8x256xf32>, vector<2x256xf32> -> vector<2x256xf32>
    %c0_3 = arith.constant 0 : index
    %c0_4 = arith.constant 0 : index
    %3 = vector.load %arg2[%c0_3, %c0_4] : memref<2x16xf32, #tpu.memory_space<vmem>>, vector<2x16xf32>
    %c0_5 = arith.constant 0 : index
    %c0_6 = arith.constant 0 : index
    %4 = vector.load %arg6[%c0_5, %c0_6] : memref<16x256xf32, #tpu.memory_space<vmem>>, vector<16x256xf32>
    %cst_7 = arith.constant dense<0.000000e+00> : vector<2x256xf32>
    %5 = tpu.matmul %3, %4, %cst_7 {dimension_numbers = #tpu.dot_dimension_numbers<[1], [0], [0], [1], [0, 0, 1, 1], [], []>} : vector<2x16xf32>, vector<16x256xf32>, vector<2x256xf32> -> vector<2x256xf32>
    %6 = arith.addf %2, %5 : vector<2x256xf32>
    %c0_8 = arith.constant 0 : index
    %c0_9 = arith.constant 0 : index
    %7 = vector.load %arg3[%c0_8, %c0_9] : memref<2x8xf32, #tpu.memory_space<vmem>>, vector<2x8xf32>
    %c0_10 = arith.constant 0 : index
    %c0_11 = arith.constant 0 : index
    %8 = vector.load %arg7[%c0_10, %c0_11] : memref<8x256xf32, #tpu.memory_space<vmem>>, vector<8x256xf32>
    %cst_12 = arith.constant dense<0.000000e+00> : vector<2x256xf32>
    %9 = tpu.matmul %7, %8, %cst_12 {dimension_numbers = #tpu.dot_dimension_numbers<[1], [0], [0], [1], [0, 0, 1, 1], [], []>} : vector<2x8xf32>, vector<8x256xf32>, vector<2x256xf32> -> vector<2x256xf32>
    %10 = arith.addf %6, %9 : vector<2x256xf32>
    %c0_13 = arith.constant 0 : index
    %c0_14 = arith.constant 0 : index
    %11 = vector.load %arg4[%c0_13, %c0_14] : memref<2x4xf32, #tpu.memory_space<vmem>>, vector<2x4xf32>
    %c0_15 = arith.constant 0 : index
    %c0_16 = arith.constant 0 : index
    %12 = vector.load %arg8[%c0_15, %c0_16] : memref<4x256xf32, #tpu.memory_space<vmem>>, vector<4x256xf32>
    %cst_17 = arith.constant dense<0.000000e+00> : vector<2x256xf32>
    %13 = tpu.matmul %11, %12, %cst_17 {dimension_numbers = #tpu.dot_dimension_numbers<[1], [0], [0], [1], [0, 0, 1, 1], [], []>} : vector<2x4xf32>, vector<4x256xf32>, vector<2x256xf32> -> vector<2x256xf32>
    %14 = arith.addf %10, %13 : vector<2x256xf32>
    %c0_18 = arith.constant 0 : index
    %c0_19 = arith.constant 0 : index
    %15 = vector.load %arg9[%c0_18, %c0_19] : memref<1x256xf32, #tpu.memory_space<vmem>>, vector<1x256xf32>
    %16 = vector.broadcast %15 : vector<1x256xf32> to vector<2x256xf32>
    %17 = arith.addf %14, %16 : vector<2x256xf32>
    %cst_20 = arith.constant 0.000000e+00 : f32
    %18 = vector.broadcast %cst_20 : f32 to vector<2x256xf32>
    %19 = arith.maximumf %17, %18 : vector<2x256xf32>
    %c0_21 = arith.constant 0 : index
    %c0_22 = arith.constant 0 : index
    %20 = vector.load %arg10[%c0_21, %c0_22] : memref<256x32xf32, #tpu.memory_space<vmem>>, vector<256x32xf32>
    %cst_23 = arith.constant dense<0.000000e+00> : vector<2x32xf32>
    %21 = tpu.matmul %19, %20, %cst_23 {dimension_numbers = #tpu.dot_dimension_numbers<[1], [0], [0], [1], [0, 0, 1, 1], [], []>} : vector<2x256xf32>, vector<256x32xf32>, vector<2x32xf32> -> vector<2x32xf32>
    %c0_24 = arith.constant 0 : index
    %c0_25 = arith.constant 0 : index
    %22 = vector.load %arg11[%c0_24, %c0_25] : memref<1x32xf32, #tpu.memory_space<vmem>>, vector<1x32xf32>
    %23 = vector.broadcast %22 : vector<1x32xf32> to vector<2x32xf32>
    %24 = arith.addf %21, %23 : vector<2x32xf32>
    %25 = math.tanh %24 : vector<2x32xf32>
    %c0_26 = arith.constant 0 : index
    %c0_27 = arith.constant 0 : index
    %26 = vector.load %arg12[%c0_26, %c0_27] : memref<2x32xf32, #tpu.memory_space<vmem>>, vector<2x32xf32>
    tpu.vector_store %arg12[%c0_26, %c0_27], %25 {strides = array<i32>} : memref<2x32xf32, #tpu.memory_space<vmem>>, vector<2x32xf32>,
    return
  }
  func.func @transform_0(%arg0: i32) -> (i32, i32) {
    %c0_i32 = arith.constant 0 : i32
    %c0_i32_0 = arith.constant 0 : i32
    return %arg0, %c0_i32 : i32, i32
  }
  func.func @transform_1(%arg0: i32) -> (i32, i32) {
    %c0_i32 = arith.constant 0 : i32
    %c0_i32_0 = arith.constant 0 : i32
    return %arg0, %c0_i32 : i32, i32
  }
  func.func @transform_2(%arg0: i32) -> (i32, i32) {
    %c0_i32 = arith.constant 0 : i32
    %c0_i32_0 = arith.constant 0 : i32
    return %arg0, %c0_i32 : i32, i32
  }
  func.func @transform_3(%arg0: i32) -> (i32, i32) {
    %c0_i32 = arith.constant 0 : i32
    %c0_i32_0 = arith.constant 0 : i32
    return %arg0, %c0_i32 : i32, i32
  }
  func.func @transform_4(%arg0: i32) -> (i32, i32) {
    %c0_i32 = arith.constant 0 : i32
    %c0_i32_0 = arith.constant 0 : i32
    %c0_i32_1 = arith.constant 0 : i32
    return %c0_i32, %c0_i32_0 : i32, i32
  }
  func.func @transform_5(%arg0: i32) -> (i32, i32) {
    %c0_i32 = arith.constant 0 : i32
    %c0_i32_0 = arith.constant 0 : i32
    %c0_i32_1 = arith.constant 0 : i32
    return %c0_i32, %c0_i32_0 : i32, i32
  }
  func.func @transform_6(%arg0: i32) -> (i32, i32) {
    %c0_i32 = arith.constant 0 : i32
    %c0_i32_0 = arith.constant 0 : i32
    %c0_i32_1 = arith.constant 0 : i32
    return %c0_i32, %c0_i32_0 : i32, i32
  }
  func.func @transform_7(%arg0: i32) -> (i32, i32) {
    %c0_i32 = arith.constant 0 : i32
    %c0_i32_0 = arith.constant 0 : i32
    %c0_i32_1 = arith.constant 0 : i32
    return %c0_i32, %c0_i32_0 : i32, i32
  }
  func.func @transform_8(%arg0: i32) -> (i32, i32) {
    %c0_i32 = arith.constant 0 : i32
    %c0_i32_0 = arith.constant 0 : i32
    %c0_i32_1 = arith.constant 0 : i32
    return %c0_i32, %c0_i32_0 : i32, i32
  }
  func.func @transform_9(%arg0: i32) -> (i32, i32) {
    %c0_i32 = arith.constant 0 : i32
    %c0_i32_0 = arith.constant 0 : i32
    %c0_i32_1 = arith.constant 0 : i32
    return %c0_i32, %c0_i32_0 : i32, i32
  }
  func.func @transform_10(%arg0: i32) -> (i32, i32) {
    %c0_i32 = arith.constant 0 : i32
    %c0_i32_0 = arith.constant 0 : i32
    %c0_i32_1 = arith.constant 0 : i32
    return %c0_i32, %c0_i32_0 : i32, i32
  }
  func.func @transform_11(%arg0: i32) -> (i32, i32) {
    %c0_i32 = arith.constant 0 : i32
    %c0_i32_0 = arith.constant 0 : i32
    return %arg0, %c0_i32 : i32, i32
  }
}

</mosaic_0001>

<llo_original>
// kernel: tpu_custom_call.1
$region0: #{tpu_custom_call.1}
  #allocation0 [shape = 'u32[]', space=smem, size = 0x4, offset = 0x4, fixed_abs, tag = 'smem constant byte address 0x4 - core index']
  #allocation1 [shape = 'u32[72,128]{1,0:T(1,128)}', space=vmem, size = 0x9000, scoped, tag = 'internal scratch']
  %s0 = inlined_call_operand.vmem [shape: f32[2,8], index: 0, kind: input, shape index: {}]
  %s1 = inlined_call_operand.vmem [shape: f32[2,16], index: 1, kind: input, shape index: {}]
  %s2 = inlined_call_operand.vmem [shape: f32[2,8], index: 2, kind: input, shape index: {}]
  %s3 = inlined_call_operand.vmem [shape: f32[2,4], index: 3, kind: input, shape index: {}]
  %s4 = inlined_call_operand.vmem [shape: f32[8,256], index: 4, kind: input, shape index: {}]
  %s5 = inlined_call_operand.vmem [shape: f32[16,256], index: 5, kind: input, shape index: {}]
  %s6 = inlined_call_operand.vmem [shape: f32[8,256], index: 6, kind: input, shape index: {}]
  %s7 = inlined_call_operand.vmem [shape: f32[4,256], index: 7, kind: input, shape index: {}]
  %s8 = inlined_call_operand.vmem [shape: f32[1,256], index: 8, kind: input, shape index: {}]
  %s9 = inlined_call_operand.vmem [shape: f32[256,32], index: 9, kind: input, shape index: {}]
  %s10 = inlined_call_operand.vmem [shape: f32[1,32], index: 10, kind: input, shape index: {}]
  %s11 = inlined_call_operand.hbm [shape: f32[2,32], index: 11, kind: output, shape index: {}]
  %s12 = sld [smem:[#allocation0]]
  $region54: #{tpu_custom_call.1} parent=0
    _
  %s14 = ssub.s32 1, %s12
  %s15 = scalar_select 0, %s14, %s12
  $region1: #{tpu_custom_call.1} parent=0
    #allocation2 [shape = 'u8[1024]{0}', space=vmem, size = 0x400, scoped, tag = 'output window, operand 0, single buffered']
    #allocation3 [shape = 's32[1]{0}', space=sflag, size = 0x4, scoped, tag = 'scoped memory for tpu_custom_call.1']
    %16 = vsyncpa [#allocation3], 0
    // Predicated region
    $region2: #{tpu_custom_call.1} parent=1 // pred_check
      _
    $region3: #{tpu_custom_call.1} parent=1 // pred_check_branch
      %18 = sbr.rel (0) target = $region5
    $region4: #{tpu_custom_call.1} parent=1 // pred_region
      _
    $region5: #{tpu_custom_call.1} parent=1 // pred_fallthru
      _
    // Predicated region
    $region6: #{tpu_custom_call.1} parent=1 // pred_check
      _
    $region7: #{tpu_custom_call.1} parent=1 // pred_check_branch
      %20 = sbr.rel (0) target = $region9
    $region8: #{tpu_custom_call.1} parent=1 // pred_region
      _
    $region9: #{tpu_custom_call.1} parent=1 // pred_fallthru
      _
    // Predicated region
    $region10: #{tpu_custom_call.1} parent=1 // pred_check
      _
    $region11: #{tpu_custom_call.1} parent=1 // pred_check_branch
      %22 = sbr.rel (0) target = $region13
    $region12: #{tpu_custom_call.1} parent=1 // pred_region
      _
    $region13: #{tpu_custom_call.1} parent=1 // pred_fallthru
      _
    // Predicated region
    $region14: #{tpu_custom_call.1} parent=1 // pred_check
      _
    $region15: #{tpu_custom_call.1} parent=1 // pred_check_branch
      %24 = sbr.rel (0) target = $region17
    $region16: #{tpu_custom_call.1} parent=1 // pred_region
      _
    $region17: #{tpu_custom_call.1} parent=1 // pred_fallthru
      _
    // Predicated region
    $region18: #{tpu_custom_call.1} parent=1 // pred_check
      _
    $region19: #{tpu_custom_call.1} parent=1 // pred_check_branch
      %26 = sbr.rel (0) target = $region21
    $region20: #{tpu_custom_call.1} parent=1 // pred_region
      _
    $region21: #{tpu_custom_call.1} parent=1 // pred_fallthru
      _
    // Predicated region
    $region22: #{tpu_custom_call.1} parent=1 // pred_check
      _
    $region23: #{tpu_custom_call.1} parent=1 // pred_check_branch
      %28 = sbr.rel (0) target = $region25
    $region24: #{tpu_custom_call.1} parent=1 // pred_region
      _
    $region25: #{tpu_custom_call.1} parent=1 // pred_fallthru
      _
    // Predicated region
    $region26: #{tpu_custom_call.1} parent=1 // pred_check
      _
    $region27: #{tpu_custom_call.1} parent=1 // pred_check_branch
      %30 = sbr.rel (0) target = $region29
    $region28: #{tpu_custom_call.1} parent=1 // pred_region
      _
    $region29: #{tpu_custom_call.1} parent=1 // pred_fallthru
      _
    // Predicated region
    $region30: #{tpu_custom_call.1} parent=1 // pred_check
      _
    $region31: #{tpu_custom_call.1} parent=1 // pred_check_branch
      %32 = sbr.rel (0) target = $region33
    $region32: #{tpu_custom_call.1} parent=1 // pred_region
      _
    $region33: #{tpu_custom_call.1} parent=1 // pred_fallthru
      _
    // Predicated region
    $region34: #{tpu_custom_call.1} parent=1 // pred_check
      _
    $region35: #{tpu_custom_call.1} parent=1 // pred_check_branch
      %34 = sbr.rel (0) target = $region37
    $region36: #{tpu_custom_call.1} parent=1 // pred_region
      _
    $region37: #{tpu_custom_call.1} parent=1 // pred_fallthru
      _
    // Predicated region
    $region38: #{tpu_custom_call.1} parent=1 // pred_check
      _
    $region39: #{tpu_custom_call.1} parent=1 // pred_check_branch
      %36 = sbr.rel (0) target = $region41
    $region40: #{tpu_custom_call.1} parent=1 // pred_region
      _
    $region41: #{tpu_custom_call.1} parent=1 // pred_fallthru
      _
    // Predicated region
    $region42: #{tpu_custom_call.1} parent=1 // pred_check
      _
    $region43: #{tpu_custom_call.1} parent=1 // pred_check_branch
      %38 = sbr.rel (0) target = $region45
    $region44: #{tpu_custom_call.1} parent=1 // pred_region
      _
    $region45: #{tpu_custom_call.1} parent=1 // pred_fallthru
      _
    %v39 = vld [vmem:[%s0] sm:$0x3]
    %v40 = vld [vmem:[%s4] sm:$0xff]
    %v41 = vld [vmem:[%s4 + $0x8] sm:$0xff]
    %v42 = vld [vmem:[%s1] sm:$0x3]
    %v43 = vld [vmem:[%s5] sm:$0xff]
    %v44 = vld [vmem:[%s5 + $0x8] sm:$0xff]
    %v45 = vld [vmem:[%s5 + $0x10] sm:$0xff]
    %v46 = vld [vmem:[%s5 + $0x18] sm:$0xff]
    %vm47 = vcmask 130048
    %v49 = vsel %vm47, %v42, 0
    %51 = vmatpush.msra.mxu0 0.0
    %52 = vmatpush.msra.mxu0 0.0
    %53 = vmatpush.msra.mxu0 0.0
    %54 = vmatpush.msra.mxu0 0.0
    %55 = vmatpush.msra.mxu0 0.0
    %56 = vmatpush.msra.mxu0 0.0
    %57 = vmatpush.msra.mxu0 0.0
    %58 = vmatpush.msra.mxu0 0.0
    %59 = vmatpush.msra.mxu0 0.0
    %60 = vmatpush.msra.mxu0 0.0
    %61 = vmatpush.msra.mxu0 0.0
    %62 = vmatpush.msra.mxu0 0.0
    %63 = vmatpush.msra.mxu0 0.0
    %64 = vmatpush.msra.mxu0 0.0
    %65 = vmatpush.msra.mxu0 %v45
    %66 = vmatpush.msra.mxu0 %v43
    %67 = vmatmul.f32.gmra.mxu0 %v49
    %v68 = vpop.f32.mrf.mxu0
    %v69 = vadd.f32 0.0, %v68
    %70 = vdwg.mxu0
    %71 = vmatpush.msra.mxu0 0.0
    %72 = vmatpush.msra.mxu0 0.0
    %73 = vmatpush.msra.mxu0 0.0
    %74 = vmatpush.msra.mxu0 0.0
    %75 = vmatpush.msra.mxu0 0.0
    %76 = vmatpush.msra.mxu0 0.0
    %77 = vmatpush.msra.mxu0 0.0
    %78 = vmatpush.msra.mxu0 0.0
    %79 = vmatpush.msra.mxu0 0.0
    %80 = vmatpush.msra.mxu0 0.0
    %81 = vmatpush.msra.mxu0 0.0
    %82 = vmatpush.msra.mxu0 0.0
    %83 = vmatpush.msra.mxu0 0.0
    %84 = vmatpush.msra.mxu0 0.0
    %85 = vmatpush.msra.mxu0 %v46
    %86 = vmatpush.msra.mxu0 %v44
    %87 = vmatmul.f32.gmra.mxu0 %v49
    %v88 = vpop.f32.mrf.mxu0
    %v89 = vadd.f32 0.0, %v88
    %90 = vdwg.mxu0
    %vm91 = vcmask 64512
    %v93 = vsel %vm91, %v39, 0
    %95 = vmatpush.msra.mxu0 0.0
    %96 = vmatpush.msra.mxu0 0.0
    %97 = vmatpush.msra.mxu0 0.0
    %98 = vmatpush.msra.mxu0 0.0
    %99 = vmatpush.msra.mxu0 0.0
    %100 = vmatpush.msra.mxu0 0.0
    %101 = vmatpush.msra.mxu0 0.0
    %102 = vmatpush.msra.mxu0 0.0
    %103 = vmatpush.msra.mxu0 0.0
    %104 = vmatpush.msra.mxu0 0.0
    %105 = vmatpush.msra.mxu0 0.0
    %106 = vmatpush.msra.mxu0 0.0
    %107 = vmatpush.msra.mxu0 0.0
    %108 = vmatpush.msra.mxu0 0.0
    %109 = vmatpush.msra.mxu0 0.0
    %110 = vmatpush.msra.mxu0 %v40
    %111 = vmatmul.f32.gmra.mxu0 %v93
    %v112 = vpop.f32.mrf.mxu0
    %v113 = vadd.f32 %v69, %v112
    %114 = vdwg.mxu0
    %115 = vmatpush.msra.mxu0 0.0
    %116 = vmatpush.msra.mxu0 0.0
    %117 = vmatpush.msra.mxu0 0.0
    %118 = vmatpush.msra.mxu0 0.0
    %119 = vmatpush.msra.mxu0 0.0
    %120 = vmatpush.msra.mxu0 0.0
    %121 = vmatpush.msra.mxu0 0.0
    %122 = vmatpush.msra.mxu0 0.0
    %123 = vmatpush.msra.mxu0 0.0
    %124 = vmatpush.msra.mxu0 0.0
    %125 = vmatpush.msra.mxu0 0.0
    %126 = vmatpush.msra.mxu0 0.0
    %127 = vmatpush.msra.mxu0 0.0
    %128 = vmatpush.msra.mxu0 0.0
    %129 = vmatpush.msra.mxu0 0.0
    %130 = vmatpush.msra.mxu0 %v41
    %131 = vmatmul.f32.gmra.mxu0 %v93
    %v132 = vpop.f32.mrf.mxu0
    %v133 = vadd.f32 %v89, %v132
    %134 = vdwg.mxu0
    %v135 = vld [vmem:[%s2] sm:$0x3]
    %v136 = vld [vmem:[%s6] sm:$0xff]
    %v137 = vld [vmem:[%s6 + $0x8] sm:$0xff]
    %v139 = vsel %vm91, %v135, 0
    %141 = vmatpush.msra.mxu0 0.0
    %142 = vmatpush.msra.mxu0 0.0
    %143 = vmatpush.msra.mxu0 0.0
    %144 = vmatpush.msra.mxu0 0.0
    %145 = vmatpush.msra.mxu0 0.0
    %146 = vmatpush.msra.mxu0 0.0
    %147 = vmatpush.msra.mxu0 0.0
    %148 = vmatpush.msra.mxu0 0.0
    %149 = vmatpush.msra.mxu0 0.0
    %150 = vmatpush.msra.mxu0 0.0
    %151 = vmatpush.msra.mxu0 0.0
    %152 = vmatpush.msra.mxu0 0.0
    %153 = vmatpush.msra.mxu0 0.0
    %154 = vmatpush.msra.mxu0 0.0
    %155 = vmatpush.msra.mxu0 0.0
    %156 = vmatpush.msra.mxu0 %v136
    %157 = vmatmul.f32.gmra.mxu0 %v139
    %v158 = vpop.f32.mrf.mxu0
    %v159 = vadd.f32 0.0, %v158
    %160 = vdwg.mxu0
    %161 = vmatpush.msra.mxu0 0.0
    %162 = vmatpush.msra.mxu0 0.0
    %163 = vmatpush.msra.mxu0 0.0
    %164 = vmatpush.msra.mxu0 0.0
    %165 = vmatpush.msra.mxu0 0.0
    %166 = vmatpush.msra.mxu0 0.0
    %167 = vmatpush.msra.mxu0 0.0
    %168 = vmatpush.msra.mxu0 0.0
    %169 = vmatpush.msra.mxu0 0.0
    %170 = vmatpush.msra.mxu0 0.0
    %171 = vmatpush.msra.mxu0 0.0
    %172 = vmatpush.msra.mxu0 0.0
    %173 = vmatpush.msra.mxu0 0.0
    %174 = vmatpush.msra.mxu0 0.0
    %175 = vmatpush.msra.mxu0 0.0
    %176 = vmatpush.msra.mxu0 %v137
    %177 = vmatmul.f32.gmra.mxu0 %v139
    %v178 = vpop.f32.mrf.mxu0
    %v179 = vadd.f32 0.0, %v178
    %180 = vdwg.mxu0
    %v181 = vadd.f32 %v113, %v159
    %v182 = vadd.f32 %v133, %v179
    %v183 = vld [vmem:[%s3] sm:$0x3]
    %v184 = vld [vmem:[%s7] sm:$0xff]
    %186 = vst [vmem:[#allocation1] ss:$2 sm:$0xff] %v184
    %v187 = vld.sshfl [vmem:[#allocation1] sm:$0xff pattern:$0x75316420]
    %v188 = vld.sshfl [vmem:[#allocation1 + $0x8] sm:$0xff pattern:$0x75316420]
    %vm189 = vcmask 31744
    %v191 = vsel %vm189, %v183, 0
    %vm193 = vcmask 1043456
    %v194 = vsel %vm193, %v187, 0
    %v196 = vsel %vm193, %v188, 0
    %198 = vmatpush.msra.mxu0 0.0
    %199 = vmatpush.msra.mxu0 0.0
    %200 = vmatpush.msra.mxu0 0.0
    %201 = vmatpush.msra.mxu0 0.0
    %202 = vmatpush.msra.mxu0 0.0
    %203 = vmatpush.msra.mxu0 0.0
    %204 = vmatpush.msra.mxu0 0.0
    %205 = vmatpush.msra.mxu0 0.0
    %206 = vmatpush.msra.mxu0 0.0
    %207 = vmatpush.msra.mxu0 0.0
    %208 = vmatpush.msra.mxu0 0.0
    %209 = vmatpush.msra.mxu0 0.0
    %210 = vmatpush.msra.mxu0 0.0
    %211 = vmatpush.msra.mxu0 0.0
    %212 = vmatpush.msra.mxu0 0.0
    %213 = vmatpush.msra.mxu0 %v194
    %214 = vmatmul.f32.gmra.mxu0 %v191
    %v215 = vpop.f32.mrf.mxu0
    %v216 = vadd.f32 0.0, %v215
    %217 = vdwg.mxu0
    %218 = vmatpush.msra.mxu0 0.0
    %219 = vmatpush.msra.mxu0 0.0
    %220 = vmatpush.msra.mxu0 0.0
    %221 = vmatpush.msra.mxu0 0.0
    %222 = vmatpush.msra.mxu0 0.0
    %223 = vmatpush.msra.mxu0 0.0
    %224 = vmatpush.msra.mxu0 0.0
    %225 = vmatpush.msra.mxu0 0.0
    %226 = vmatpush.msra.mxu0 0.0
    %227 = vmatpush.msra.mxu0 0.0
    %228 = vmatpush.msra.mxu0 0.0
    %229 = vmatpush.msra.mxu0 0.0
    %230 = vmatpush.msra.mxu0 0.0
    %231 = vmatpush.msra.mxu0 0.0
    %232 = vmatpush.msra.mxu0 0.0
    %233 = vmatpush.msra.mxu0 %v196
    %234 = vmatmul.f32.gmra.mxu0 %v191
    %v235 = vpop.f32.mrf.mxu0
    %v236 = vadd.f32 0.0, %v235
    %237 = vdwg.mxu0
    %v238 = vadd.f32 %v181, %v216
    %v239 = vadd.f32 %v182, %v236
    %v240 = vld [vmem:[%s8] sm:$0x3]
    %v242 = vperm.slane %v240, 0
    %v243 = vperm.slane %v240, 1
    %v246 = vadd.f32 %v238, %v242
    %v247 = vadd.f32 %v239, %v243
    %v248 = vmax.f32 %v246, 0.0
    %v249 = vmax.f32 %v247, 0.0
    %v250 = vld [vmem:[%s9] sm:$0xff]
    %v251 = vld [vmem:[%s9 + $0x8] sm:$0xff]
    %v252 = vld [vmem:[%s9 + $0x10] sm:$0xff]
    %v253 = vld [vmem:[%s9 + $0x18] sm:$0xff]
    %v254 = vld [vmem:[%s9 + $0x20] sm:$0xff]
    %v255 = vld [vmem:[%s9 + $0x28] sm:$0xff]
    %v256 = vld [vmem:[%s9 + $0x30] sm:$0xff]
    %v257 = vld [vmem:[%s9 + $0x38] sm:$0xff]
    %v258 = vld [vmem:[%s9 + $0x40] sm:$0xff]
    %v259 = vld [vmem:[%s9 + $0x48] sm:$0xff]
    %v260 = vld [vmem:[%s9 + $0x50] sm:$0xff]
    %v261 = vld [vmem:[%s9 + $0x58] sm:$0xff]
    %v262 = vld [vmem:[%s9 + $0x60] sm:$0xff]
    %v263 = vld [vmem:[%s9 + $0x68] sm:$0xff]
    %v264 = vld [vmem:[%s9 + $0x70] sm:$0xff]
    %v265 = vld [vmem:[%s9 + $0x78] sm:$0xff]
    %v266 = vld [vmem:[%s9 + $0x80] sm:$0xff]
    %v267 = vld [vmem:[%s9 + $0x88] sm:$0xff]
    %v268 = vld [vmem:[%s9 + $0x90] sm:$0xff]
    %v269 = vld [vmem:[%s9 + $0x98] sm:$0xff]
    %v270 = vld [vmem:[%s9 + $0xa0] sm:$0xff]
    %v271 = vld [vmem:[%s9 + $0xa8] sm:$0xff]
    %v272 = vld [vmem:[%s9 + $0xb0] sm:$0xff]
    %v273 = vld [vmem:[%s9 + $0xb8] sm:$0xff]
    %v274 = vld [vmem:[%s9 + $0xc0] sm:$0xff]
    %v275 = vld [vmem:[%s9 + $0xc8] sm:$0xff]
    %v276 = vld [vmem:[%s9 + $0xd0] sm:$0xff]
    %v277 = vld [vmem:[%s9 + $0xd8] sm:$0xff]
    %v278 = vld [vmem:[%s9 + $0xe0] sm:$0xff]
    %v279 = vld [vmem:[%s9 + $0xe8] sm:$0xff]
    %v280 = vld [vmem:[%s9 + $0xf0] sm:$0xff]
    %v281 = vld [vmem:[%s9 + $0xf8] sm:$0xff]
    %v282 = vld [vmem:[%s10] sm:$0x1]
    %v284 = vperm.slane %v282, 0
    %286 = vmatpush.msra.mxu0 %v265
    %287 = vmatpush.msra.mxu0 %v264
    %288 = vmatpush.msra.mxu0 %v263
    %289 = vmatpush.msra.mxu0 %v262
    %290 = vmatpush.msra.mxu0 %v261
    %291 = vmatpush.msra.mxu0 %v260
    %292 = vmatpush.msra.mxu0 %v259
    %293 = vmatpush.msra.mxu0 %v258
    %294 = vmatpush.msra.mxu0 %v257
    %295 = vmatpush.msra.mxu0 %v256
    %296 = vmatpush.msra.mxu0 %v255
    %297 = vmatpush.msra.mxu0 %v254
    %298 = vmatpush.msra.mxu0 %v253
    %299 = vmatpush.msra.mxu0 %v252
    %300 = vmatpush.msra.mxu0 %v251
    %301 = vmatpush.msra.mxu0 %v250
    %302 = vmatmul.f32.gmra.mxu0 %v248
    %v303 = vpop.f32.mrf.mxu0
    %v304 = vadd.f32 %v284, %v303
    %305 = vdwg.mxu0
    %306 = vmatpush.msra.mxu0 %v281
    %307 = vmatpush.msra.mxu0 %v280
    %308 = vmatpush.msra.mxu0 %v279
    %309 = vmatpush.msra.mxu0 %v278
    %310 = vmatpush.msra.mxu0 %v277
    %311 = vmatpush.msra.mxu0 %v276
    %312 = vmatpush.msra.mxu0 %v275
    %313 = vmatpush.msra.mxu0 %v274
    %314 = vmatpush.msra.mxu0 %v273
    %315 = vmatpush.msra.mxu0 %v272
    %316 = vmatpush.msra.mxu0 %v271
    %317 = vmatpush.msra.mxu0 %v270
    %318 = vmatpush.msra.mxu0 %v269
    %319 = vmatpush.msra.mxu0 %v268
    %320 = vmatpush.msra.mxu0 %v267
    %321 = vmatpush.msra.mxu0 %v266
    %322 = vmatmul.f32.gmra.mxu0 %v249
    %v323 = vpop.f32.mrf.mxu0
    %v324 = vadd.f32 %v304, %v323
    %325 = vdwg.mxu0
    %v326 = vtanh.pop %v324
    %vm327 = vcmask 254976
    %328 = vst.msk [vmem:[#allocation2] sm:$0x3] %vm327, %v326
    // Predicated region
    $region46: #{tpu_custom_call.1} parent=1 // pred_check
      _
    $region47: #{tpu_custom_call.1} parent=1 // pred_check_branch
      %330 = sbr.rel (0) target = $region49
    $region48: #{tpu_custom_call.1} parent=1 // pred_region
      %332 = vsyncadd [#allocation3], 0
      %s334 = sshll.u32 [#allocation2], 4
      %s335 = int_to_ptr.vmem [resolvable:$true] %s334
      %s336 = sshll.u32 %s11, 4
      %s337 = int_to_ptr.hbm [resolvable:$true] %s336
      %339 = dma.vmem_to_hbm [thread:$0]  %s335, 32, %s337, [#allocation3]
    $region49: #{tpu_custom_call.1} parent=1 // pred_fallthru
      _
    // Predicated region
    $region50: #{tpu_custom_call.1} parent=1 // pred_check
      _
    $region51: #{tpu_custom_call.1} parent=1 // pred_check_branch
      %341 = sbr.rel (0) target = $region53
    $region52: #{tpu_custom_call.1} parent=1 // pred_region
      %343 = dma.done [#allocation3], 32
    $region53: #{tpu_custom_call.1} parent=1 // pred_fallthru
      _
    %344 = vsyncpa [#allocation3], 1

</llo_original>
